<compile_context>
chip_gen: v5e
topology: v5e:2x2
jax: 0.10.0
libtpu: 0.0.40
codegen_flags: <defaults>
</compile_context>

<pallas_src>
import jax
import jax.numpy as jnp
from jax.experimental import pallas as pl
from jax.experimental.pallas import tpu as pltpu

_LANE = 128
_SUBLANE = 8
_TB_MAX = 1024           # max batch-tile rows; single-TC chips want few, big steps
_PALLAS_MIN_BATCH = 128  # below this an XLA dot chain beats Pallas dispatch overhead


def _round_up(x, m):
    return ((x + m - 1) // m) * m


def _pad2d(a, rows, cols):
    return jnp.pad(a, ((0, rows - a.shape[0]), (0, cols - a.shape[1])))


def init_params(key, z_dim, hidden_layer_dim, input_dim, init_logvar):
    """Deterministic synthetic parameter init (uniform, PyTorch-Linear fan-in bound)."""
    sizes = [z_dim] + list(hidden_layer_dim)          # decoder_layers (last linear dropped)
    params = []
    keys = jax.random.split(key, 2 * len(sizes))
    k_idx = 0
    for d_in, d_out in zip(sizes[:-1], sizes[1:]):
        bound = 1.0 / jnp.sqrt(d_in)
        w = jax.random.uniform(keys[k_idx], (d_in, d_out), jnp.float32, -bound, bound)
        b = jax.random.uniform(keys[k_idx + 1], (1, d_out), jnp.float32, -bound, bound)
        params += [w, b]
        k_idx += 2
    d_in, d_out = sizes[-1], input_dim                # dec_mean_layer
    bound = 1.0 / jnp.sqrt(d_in)
    wm = jax.random.uniform(keys[k_idx], (d_in, d_out), jnp.float32, -bound, bound)
    bm = jax.random.uniform(keys[k_idx + 1], (1, d_out), jnp.float32, -bound, bound)
    params += [wm, bm]
    logvar = jnp.full((1, input_dim), init_logvar, dtype=jnp.float32)
    params.append(logvar)
    return tuple(params)


def pack_params(params):
    """One-time repack: pad internal layer widths to 128 lanes, cast weights to bf16,
    stack the biases into one buffer, precompute the constant `scale`.  Also keeps the
    raw f32 params for the small-batch XLA bypass."""
    w0, b0, w1, b1, wm, bm, logvar = params
    z_dim, h0 = w0.shape
    _, h1 = w1.shape
    _, d = wm.shape
    h0p, h1p, dp = (_round_up(x, _LANE) for x in (h0, h1, d))
    pmax = max(h0p, h1p, dp)

    w0p = _pad2d(w0, z_dim, h0p).astype(jnp.bfloat16)
    w1p = _pad2d(w1, h0p, h1p).astype(jnp.bfloat16)
    wmp = _pad2d(wm, h1p, dp).astype(jnp.bfloat16)
    b_pack = jnp.stack([
        _pad2d(b0, 1, pmax)[0],
        _pad2d(b1, 1, pmax)[0],
        _pad2d(bm, 1, pmax)[0],
    ]).astype(jnp.float32)                            # (3, pmax)

    scale = jnp.exp(0.5 * logvar)                     # (1, d); batch-independent constant
    dims = dict(z_dim=z_dim, d=d, h0p=h0p, h1p=h1p, dp=dp, pmax=pmax)
    return dict(w0=w0p, w1=w1p, wm=wmp, b=b_pack, scale=scale, dims=dims,
                raw=(w0, b0, w1, b1, wm, bm))


def _make_kernel(h0p, h1p, dp, d):
    def kernel(z_ref, w0_ref, w1_ref, wm_ref, b_ref, loc_ref):
        # z arrives pre-cast to bf16; MXU matmuls accumulate in f32;
        # bias-add / ReLU epilogue stays f32 (v5e-safe VPU).
        x = z_ref[...]

        h = jnp.dot(x, w0_ref[...], preferred_element_type=jnp.float32)
        h = jnp.maximum(h + b_ref[0:1, :h0p], 0.0)                 # layer 0 + ReLU

        h = jnp.dot(h.astype(jnp.bfloat16), w1_ref[...],
                    preferred_element_type=jnp.float32)
        h = jnp.maximum(h + b_ref[1:2, :h1p], 0.0)                 # layer 1 + ReLU

        loc = jnp.dot(h.astype(jnp.bfloat16), wm_ref[...],
                      preferred_element_type=jnp.float32)
        loc = loc + b_ref[2:3, :dp]                                # mean layer
        # Drop the zero padding in-register: only d real columns go to HBM.
        loc_ref[...] = loc[:, :d].astype(loc_ref.dtype)
    return kernel


def _bypass_forward(z, packed):
    """Small-batch path: exact f32 module semantics as one fused XLA dot chain."""
    w0, b0, w1, b1, wm, bm = packed["raw"]
    h = jnp.maximum(z @ w0 + b0, 0.0)
    h = jnp.maximum(h @ w1 + b1, 0.0)
    return h @ wm + bm, packed["scale"]


def variational_decoder_forward(z, packed, *, force_pallas=False):
    """Forward pass. Returns (loc, scale) as the module's Normal(loc, scale) would use.
    `scale` has shape (1, input_dim) (batch-independent), matching the PyTorch module."""
    B = z.shape[0]
    if B < _PALLAS_MIN_BATCH and not force_pallas:
        return _bypass_forward(z, packed)

    dims = packed["dims"]
    z_dim, d = dims["z_dim"], dims["d"]
    h0p, h1p, dp, pmax = dims["h0p"], dims["h1p"], dims["dp"], dims["pmax"]
    w0p, w1p, wmp, b_pack = packed["w0"], packed["w1"], packed["wm"], packed["b"]

    # >=2 grid steps whenever possible (keeps both v7x TensorCores busy; the extra
    # ~0.35us step is noise on single-TC v5e/v6e), capped at _TB_MAX rows per tile,
    # always a multiple of 8 rows (sublane) so tile stores stay unmasked.
    tb = min(_TB_MAX, _round_up(max((B + 1) // 2, 1), _SUBLANE))
    b_pad = _round_up(B, tb)
    grid = (b_pad // tb,)

    z_bf = z.astype(jnp.bfloat16)                     # halve z DMA; MXU wants bf16 anyway
    if b_pad != B:
        z_bf = jnp.pad(z_bf, ((0, b_pad - B), (0, 0)))

    flops = 2 * b_pad * (z_dim * h0p + h0p * h1p + h1p * dp)
    bytes_accessed = (z_bf.size * 2 + w0p.size * 2 + w1p.size * 2 + wmp.size * 2
                      + b_pack.size * 4 + b_pad * d * 4)

    loc_out = pl.pallas_call(
        _make_kernel(h0p, h1p, dp, d),
        out_shape=jax.ShapeDtypeStruct((b_pad, d), jnp.float32),   # unpadded lane width
        grid_spec=pltpu.PrefetchScalarGridSpec(
            num_scalar_prefetch=0,
            grid=grid,
            in_specs=[
                pl.BlockSpec((tb, z_dim), lambda i: (i, 0)),    # z batch tile (bf16)
                pl.BlockSpec((z_dim, h0p), lambda i: (0, 0)),   # W0 (VMEM-resident)
                pl.BlockSpec((h0p, h1p), lambda i: (0, 0)),     # W1 (VMEM-resident)
                pl.BlockSpec((h1p, dp), lambda i: (0, 0)),      # Wm (VMEM-resident)
                pl.BlockSpec((3, pmax), lambda i: (0, 0)),      # packed biases
            ],
            out_specs=pl.BlockSpec((tb, d), lambda i: (i, 0)),  # d == full last dim -> legal
        ),
        compiler_params=pltpu.CompilerParams(
            dimension_semantics=("parallel",)),                 # megacore-friendly on v7x
        cost_estimate=pl.CostEstimate(
            flops=flops, transcendentals=0, bytes_accessed=bytes_accessed),
    )(z_bf, w0p, w1p, wmp, b_pack)

    loc = loc_out[:B] if b_pad != B else loc_out
    return loc, packed["scale"]


def reference_forward(z, params):
    """Plain-JAX reference mirroring the kernel numerics (bf16 matmuls, f32 accum)."""
    w0, b0, w1, b1, wm, bm, logvar = params
    bf = jnp.bfloat16
    h = jnp.maximum(jnp.dot(z.astype(bf), w0.astype(bf),
                            preferred_element_type=jnp.float32) + b0, 0.0)
    h = jnp.maximum(jnp.dot(h.astype(bf), w1.astype(bf),
                            preferred_element_type=jnp.float32) + b1, 0.0)
    loc = jnp.dot(h.astype(bf), wm.astype(bf),
                  preferred_element_type=jnp.float32) + bm
    return loc, jnp.exp(0.5 * logvar)


def reference_forward_f32(z, params):
    """Full-precision reference of the original module semantics."""
    w0, b0, w1, b1, wm, bm, logvar = params
    h = jnp.maximum(z @ w0 + b0, 0.0)
    h = jnp.maximum(h @ w1 + b1, 0.0)
    return h @ wm + bm, jnp.exp(0.5 * logvar)


if __name__ == "__main__":
    # Shapes consistent with the module: input_dim=16, z_dim=8,
    # hidden_layer_dim=[32, 64], non_linear=True, bias=True, init_logvar=-3.0
    z_dim, input_dim = 8, 16
    hidden_layer_dim = [32, 64]
    init_logvar = -3.0

    key = jax.random.PRNGKey(0)
    k_z1, k_z2, k_p = jax.random.split(key, 3)
    params = init_params(k_p, z_dim, hidden_layer_dim, input_dim, init_logvar)
    packed = pack_params(params)

    # 1) Pallas path: batch above the bypass threshold -> grid of 2 batch tiles.
    B_big = 256
    z_big = jax.random.normal(k_z1, (B_big, z_dim), dtype=jnp.float32)
    loc_big, scale = variational_decoder_forward(z_big, packed)
    jax.block_until_ready((loc_big, scale))

    loc_ref_bf, scale_ref = reference_forward(z_big, params)
    loc_ref_f32, _ = reference_forward_f32(z_big, params)
    assert loc_big.shape == (B_big, input_dim) and scale.shape == (1, input_dim)
    assert jnp.allclose(loc_big, loc_ref_bf, atol=2e-3, rtol=2e-3)   # bf16-MXU numerics
    assert jnp.allclose(loc_big, loc_ref_f32, atol=5e-2, rtol=5e-2)  # module semantics
    assert jnp.allclose(scale, scale_ref, atol=1e-6, rtol=1e-6)

    # 2) Small-batch bypass (B=8): exact f32 module semantics, no Pallas dispatch.
    B_small = 8
    z_small = jax.random.normal(k_z2, (B_small, z_dim), dtype=jnp.float32)
    loc_small, scale_s = variational_decoder_forward(z_small, packed)
    jax.block_until_ready((loc_small, scale_s))
    loc_small_f32, _ = reference_forward_f32(z_small, params)
    assert loc_small.shape == (B_small, input_dim)
    assert jnp.allclose(loc_small, loc_small_f32, atol=1e-5, rtol=1e-5)
    assert jnp.allclose(scale_s, scale_ref, atol=1e-6, rtol=1e-6)

    # 3) Coverage: force the Pallas kernel at the tiny batch too (single 8-row tile).
    loc_small_k, _ = variational_decoder_forward(z_small, packed, force_pallas=True)
    jax.block_until_ready(loc_small_k)
    loc_small_bf, _ = reference_forward(z_small, params)
    assert jnp.allclose(loc_small_k, loc_small_bf, atol=2e-3, rtol=2e-3)

    print("KERNEL_OK")
</pallas_src>

<mosaic_0001>
module attributes {stable_mosaic.version = 11 : i64} {
  func.func @kernel(%arg0: i32, %arg1: memref<128x8xbf16, #tpu.memory_space<vmem>>, %arg2: memref<8x128xbf16, #tpu.memory_space<vmem>>, %arg3: memref<128x128xbf16, #tpu.memory_space<vmem>>, %arg4: memref<128x128xbf16, #tpu.memory_space<vmem>>, %arg5: memref<3x128xf32, #tpu.memory_space<vmem>>, %arg6: memref<128x16xf32, #tpu.memory_space<vmem>>) attributes {dimension_semantics = [#tpu.dimension_semantics<parallel>], iteration_bounds = array<i64: 2>, scalar_prefetch = 0 : i64, scratch_operands = 0 : i64, tpu.core_type = #tpu.core_type<tc>, window_params = [{transform_indices = @transform_0, window_bounds = array<i64: 128, 8>}, {pipeline_mode = #tpu.pipeline_mode<synchronous>, transform_indices = @transform_1, window_bounds = array<i64: 8, 128>}, {pipeline_mode = #tpu.pipeline_mode<synchronous>, transform_indices = @transform_2, window_bounds = array<i64: 128, 128>}, {pipeline_mode = #tpu.pipeline_mode<synchronous>, transform_indices = @transform_3, window_bounds = array<i64: 128, 128>}, {pipeline_mode = #tpu.pipeline_mode<synchronous>, transform_indices = @transform_4, window_bounds = array<i64: 3, 128>}, {transform_indices = @transform_5, window_bounds = array<i64: 128, 16>}]} {
    %c0 = arith.constant 0 : index
    %c0_0 = arith.constant 0 : index
    %0 = vector.load %arg1[%c0, %c0_0] : memref<128x8xbf16, #tpu.memory_space<vmem>>, vector<128x8xbf16>
    %c0_1 = arith.constant 0 : index
    %c0_2 = arith.constant 0 : index
    %1 = vector.load %arg2[%c0_1, %c0_2] : memref<8x128xbf16, #tpu.memory_space<vmem>>, vector<8x128xbf16>
    %cst = arith.constant dense<0.000000e+00> : vector<128x128xf32>
    %2 = tpu.matmul %0, %1, %cst {dimension_numbers = #tpu.dot_dimension_numbers<[1], [0], [0], [1], [0, 0, 1, 1], [], []>} : vector<128x8xbf16>, vector<8x128xbf16>, vector<128x128xf32> -> vector<128x128xf32>
    %c0_3 = arith.constant 0 : index
    %c0_4 = arith.constant 0 : index
    %3 = vector.load %arg5[%c0_3, %c0_4] : memref<3x128xf32, #tpu.memory_space<vmem>>, vector<1x128xf32>
    %4 = vector.broadcast %3 : vector<1x128xf32> to vector<128x128xf32>
    %5 = arith.addf %2, %4 : vector<128x128xf32>
    %cst_5 = arith.constant 0.000000e+00 : f32
    %6 = vector.broadcast %cst_5 : f32 to vector<128x128xf32>
    %7 = arith.maximumf %5, %6 : vector<128x128xf32>
    %8 = arith.truncf %7 : vector<128x128xf32> to vector<128x128xbf16>
    %c0_6 = arith.constant 0 : index
    %c0_7 = arith.constant 0 : index
    %9 = vector.load %arg3[%c0_6, %c0_7] : memref<128x128xbf16, #tpu.memory_space<vmem>>, vector<128x128xbf16>
    %cst_8 = arith.constant dense<0.000000e+00> : vector<128x128xf32>
    %10 = tpu.matmul %8, %9, %cst_8 {dimension_numbers = #tpu.dot_dimension_numbers<[1], [0], [0], [1], [0, 0, 1, 1], [], []>} : vector<128x128xbf16>, vector<128x128xbf16>, vector<128x128xf32> -> vector<128x128xf32>
    %c1 = arith.constant 1 : index
    %c0_9 = arith.constant 0 : index
    %11 = vector.load %arg5[%c1, %c0_9] : memref<3x128xf32, #tpu.memory_space<vmem>>, vector<1x128xf32>
    %12 = vector.broadcast %11 : vector<1x128xf32> to vector<128x128xf32>
    %13 = arith.addf %10, %12 : vector<128x128xf32>
    %cst_10 = arith.constant 0.000000e+00 : f32
    %14 = vector.broadcast %cst_10 : f32 to vector<128x128xf32>
    %15 = arith.maximumf %13, %14 : vector<128x128xf32>
    %16 = arith.truncf %15 : vector<128x128xf32> to vector<128x128xbf16>
    %c0_11 = arith.constant 0 : index
    %c0_12 = arith.constant 0 : index
    %17 = vector.load %arg4[%c0_11, %c0_12] : memref<128x128xbf16, #tpu.memory_space<vmem>>, vector<128x128xbf16>
    %cst_13 = arith.constant dense<0.000000e+00> : vector<128x128xf32>
    %18 = tpu.matmul %16, %17, %cst_13 {dimension_numbers = #tpu.dot_dimension_numbers<[1], [0], [0], [1], [0, 0, 1, 1], [], []>} : vector<128x128xbf16>, vector<128x128xbf16>, vector<128x128xf32> -> vector<128x128xf32>
    %c2 = arith.constant 2 : index
    %c0_14 = arith.constant 0 : index
    %19 = vector.load %arg5[%c2, %c0_14] : memref<3x128xf32, #tpu.memory_space<vmem>>, vector<1x128xf32>
    %20 = vector.broadcast %19 : vector<1x128xf32> to vector<128x128xf32>
    %21 = arith.addf %18, %20 : vector<128x128xf32>
    %22 = vector.extract_strided_slice %21 {offsets = [0, 0], sizes = [128, 16], strides = [1, 1]} : vector<128x128xf32> to vector<128x16xf32>
    %c0_15 = arith.constant 0 : index
    %c0_16 = arith.constant 0 : index
    %23 = vector.load %arg6[%c0_15, %c0_16] : memref<128x16xf32, #tpu.memory_space<vmem>>, vector<128x16xf32>
    tpu.vector_store %arg6[%c0_15, %c0_16], %22 {strides = array<i32>} : memref<128x16xf32, #tpu.memory_space<vmem>>, vector<128x16xf32>,
    return
  }
  func.func @transform_0(%arg0: i32) -> (i32, i32) {
    %c0_i32 = arith.constant 0 : i32
    %c0_i32_0 = arith.constant 0 : i32
    return %arg0, %c0_i32 : i32, i32
  }
  func.func @transform_1(%arg0: i32) -> (i32, i32) {
    %c0_i32 = arith.constant 0 : i32
    %c0_i32_0 = arith.constant 0 : i32
    %c0_i32_1 = arith.constant 0 : i32
    return %c0_i32, %c0_i32_0 : i32, i32
  }
  func.func @transform_2(%arg0: i32) -> (i32, i32) {
    %c0_i32 = arith.constant 0 : i32
    %c0_i32_0 = arith.constant 0 : i32
    %c0_i32_1 = arith.constant 0 : i32
    return %c0_i32, %c0_i32_0 : i32, i32
  }
  func.func @transform_3(%arg0: i32) -> (i32, i32) {
    %c0_i32 = arith.constant 0 : i32
    %c0_i32_0 = arith.constant 0 : i32
    %c0_i32_1 = arith.constant 0 : i32
    return %c0_i32, %c0_i32_0 : i32, i32
  }
  func.func @transform_4(%arg0: i32) -> (i32, i32) {
    %c0_i32 = arith.constant 0 : i32
    %c0_i32_0 = arith.constant 0 : i32
    %c0_i32_1 = arith.constant 0 : i32
    return %c0_i32, %c0_i32_0 : i32, i32
  }
  func.func @transform_5(%arg0: i32) -> (i32, i32) {
    %c0_i32 = arith.constant 0 : i32
    %c0_i32_0 = arith.constant 0 : i32
    return %arg0, %c0_i32 : i32, i32
  }
}

</mosaic_0001>

<llo_original>
// kernel: tpu_custom_call.1
$region0: #{tpu_custom_call.1}
  #allocation0 [shape = 'u32[]', space=smem, size = 0x4, offset = 0x4, fixed_abs, tag = 'smem constant byte address 0x4 - core index']
  #allocation1 [shape = 'u32[72,128]{1,0:T(1,128)}', space=vmem, size = 0x9000, scoped, tag = 'internal scratch']
  %s0 = inlined_call_operand.vmem [shape: bf16[256,8], index: 0, kind: input, shape index: {}]
  %s1 = inlined_call_operand.vmem [shape: bf16[8,128], index: 1, kind: input, shape index: {}]
  %s2 = inlined_call_operand.vmem [shape: bf16[128,128], index: 2, kind: input, shape index: {}]
  %s3 = inlined_call_operand.vmem [shape: bf16[128,128], index: 3, kind: input, shape index: {}]
  %s4 = inlined_call_operand.vmem [shape: f32[3,128], index: 4, kind: input, shape index: {}]
  %s5 = inlined_call_operand.vmem [shape: f32[256,16], index: 5, kind: output, shape index: {}]
  %s6 = sld [smem:[#allocation0]]
  $region53: #{tpu_custom_call.1} parent=0
    _
  %s8 = ssub.s32 1, %s6
  %s9 = scalar_select 0, %s8, %s6
  loop: start=0, step=1, limit=4
  $region2: #{tpu_custom_call.1} parent=0 // loop_pre_header
    _
  $region3: #{tpu_custom_call.1} parent=0 // loop_header
    %s11 = sphi 0, %s15
    %p12 = scmp.ge.s32.totalorder %s11, 4
    %s21 = sphi 0, %s23
    %s24 = sphi 0, %s21
    %s25 = sphi 0, %s24
    %s41 = sphi 0, %s25
    %s45 = sphi 0, %s45
    %s47 = sphi 0, %s45
    %s48 = sphi 0, %s47
    %s62 = sphi 0, %s48
    %s66 = sphi 0, %s66
    %s68 = sphi 0, %s66
    %s69 = sphi 0, %s68
    %s83 = sphi 0, %s69
    %s87 = sphi 0, %s87
    %s89 = sphi 0, %s87
    %s90 = sphi 0, %s89
    %s104 = sphi 0, %s90
    %s108 = sphi 0, %s108
    %s110 = sphi 0, %s108
    %s111 = sphi 0, %s110
    %s125 = sphi 0, %s111
    %s131 = sphi 0, %s133
    %s134 = sphi 0, %s131
    %s135 = sphi 0, %s134
    %s151 = sphi 0, %s135
  $region4: #{tpu_custom_call.1} parent=0 // loop_header_branch
    %14 = sbr.rel (%p12) target = $region8
  $region5: #{tpu_custom_call.1} parent=0 // loop_body
    %s16 = ssub.s32 %s11, 1
    %s17 = ssub.s32 %s11, 2
    %s18 = sadd.s32 %s11, 1
    %s19 = ssub.s32 %s11, %s18
    %p20 = scmp.eq.s32.totalorder %s19, 0
    %s22 = sadd.s32 %s21, 1
    %s23 = scalar_select %p20, %s21, %s22
    %p26 = pneg %p20
    %p27 = scmp.eq.s32.totalorder %s11, 1
    %p28 = por %p26, %p27
    %p29 = scmp.ne.s32.totalorder %s21, %s24
    %p30 = scmp.eq.s32.totalorder %s11, 0
    %p31 = por %p29, %p30
    %p32 = scmp.ne.s32.totalorder %s21, %s24
    %p33 = scmp.eq.s32.totalorder %s16, 1
    %p34 = por %p32, %p33
    %p35 = scmp.ne.s32.totalorder %s24, %s25
    %p36 = scmp.eq.s32.totalorder %s16, 0
    %p37 = por %p35, %p36
    %p38 = scmp.ne.s32.totalorder %s24, %s25
    %p39 = scmp.eq.s32.totalorder %s17, 1
    %p40 = por %p38, %p39
    %p42 = scmp.ne.s32.totalorder %s25, %s41
    %p43 = scmp.eq.s32.totalorder %s17, 0
    %p44 = por %p42, %p43
    %s46 = sadd.s32 %s45, 1
    %p49 = scmp.eq.s32.totalorder %s11, 1
    %p50 = scmp.ne.s32.totalorder %s45, %s47
    %p51 = scmp.eq.s32.totalorder %s11, 0
    %p52 = por %p50, %p51
    %p53 = scmp.ne.s32.totalorder %s45, %s47
    %p54 = scmp.eq.s32.totalorder %s16, 1
    %p55 = por %p53, %p54
    %p56 = scmp.ne.s32.totalorder %s47, %s48
    %p57 = scmp.eq.s32.totalorder %s16, 0
    %p58 = por %p56, %p57
    %p59 = scmp.ne.s32.totalorder %s47, %s48
    %p60 = scmp.eq.s32.totalorder %s17, 1
    %p61 = por %p59, %p60
    %p63 = scmp.ne.s32.totalorder %s48, %s62
    %p64 = scmp.eq.s32.totalorder %s17, 0
    %p65 = por %p63, %p64
    %s67 = sadd.s32 %s66, 1
    %p70 = scmp.eq.s32.totalorder %s11, 1
    %p71 = scmp.ne.s32.totalorder %s66, %s68
    %p72 = scmp.eq.s32.totalorder %s11, 0
    %p73 = por %p71, %p72
    %p74 = scmp.ne.s32.totalorder %s66, %s68
    %p75 = scmp.eq.s32.totalorder %s16, 1
    %p76 = por %p74, %p75
    %p77 = scmp.ne.s32.totalorder %s68, %s69
    %p78 = scmp.eq.s32.totalorder %s16, 0
    %p79 = por %p77, %p78
    %p80 = scmp.ne.s32.totalorder %s68, %s69
    %p81 = scmp.eq.s32.totalorder %s17, 1
    %p82 = por %p80, %p81
    %p84 = scmp.ne.s32.totalorder %s69, %s83
    %p85 = scmp.eq.s32.totalorder %s17, 0
    %p86 = por %p84, %p85
    %s88 = sadd.s32 %s87, 1
    %p91 = scmp.eq.s32.totalorder %s11, 1
    %p92 = scmp.ne.s32.totalorder %s87, %s89
    %p93 = scmp.eq.s32.totalorder %s11, 0
    %p94 = por %p92, %p93
    %p95 = scmp.ne.s32.totalorder %s87, %s89
    %p96 = scmp.eq.s32.totalorder %s16, 1
    %p97 = por %p95, %p96
    %p98 = scmp.ne.s32.totalorder %s89, %s90
    %p99 = scmp.eq.s32.totalorder %s16, 0
    %p100 = por %p98, %p99
    %p101 = scmp.ne.s32.totalorder %s89, %s90
    %p102 = scmp.eq.s32.totalorder %s17, 1
    %p103 = por %p101, %p102
    %p105 = scmp.ne.s32.totalorder %s90, %s104
    %p106 = scmp.eq.s32.totalorder %s17, 0
    %p107 = por %p105, %p106
    %s109 = sadd.s32 %s108, 1
    %p112 = scmp.eq.s32.totalorder %s11, 1
    %p113 = scmp.ne.s32.totalorder %s108, %s110
    %p114 = scmp.eq.s32.totalorder %s11, 0
    %p115 = por %p113, %p114
    %p116 = scmp.ne.s32.totalorder %s108, %s110
    %p117 = scmp.eq.s32.totalorder %s16, 1
    %p118 = por %p116, %p117
    %p119 = scmp.ne.s32.totalorder %s110, %s111
    %p120 = scmp.eq.s32.totalorder %s16, 0
    %p121 = por %p119, %p120
    %p122 = scmp.ne.s32.totalorder %s110, %s111
    %p123 = scmp.eq.s32.totalorder %s17, 1
    %p124 = por %p122, %p123
    %p126 = scmp.ne.s32.totalorder %s111, %s125
    %p127 = scmp.eq.s32.totalorder %s17, 0
    %p128 = por %p126, %p127
    %s129 = ssub.s32 %s11, %s18
    %p130 = scmp.eq.s32.totalorder %s129, 0
    %s132 = sadd.s32 %s131, 1
    %s133 = scalar_select %p130, %s131, %s132
    %p136 = pneg %p130
    %p137 = scmp.eq.s32.totalorder %s11, 1
    %p138 = por %p136, %p137
    %p139 = scmp.ne.s32.totalorder %s131, %s134
    %p140 = scmp.eq.s32.totalorder %s11, 0
    %p141 = por %p139, %p140
    %p142 = scmp.ne.s32.totalorder %s131, %s134
    %p143 = scmp.eq.s32.totalorder %s16, 1
    %p144 = por %p142, %p143
    %p145 = scmp.ne.s32.totalorder %s134, %s135
    %p146 = scmp.eq.s32.totalorder %s16, 0
    %p147 = por %p145, %p146
    %p148 = scmp.ne.s32.totalorder %s134, %s135
    %p149 = scmp.eq.s32.totalorder %s17, 1
    %p150 = por %p148, %p149
    %p152 = scmp.ne.s32.totalorder %s135, %s151
    %p153 = scmp.eq.s32.totalorder %s17, 0
    %p154 = por %p152, %p153
    %p155 = scmp.le.s32.totalorder 1, %s11
    %p156 = scmp.lt.s32.totalorder %s11, 3
    %p157 = pnand %p155, %p156
    %p158 = pneg %p157
    // Predicated region
    $region9: #{tpu_custom_call.1} parent=5 // pred_check
      _
    $region10: #{tpu_custom_call.1} parent=5 // pred_check_branch
      %160 = sbr.rel (%p157) target = $region12
    $region11: #{tpu_custom_call.1} parent=5 // pred_region
      %s161 = ssub.s32 %s11, 1
      // Predicated region
      $region13: #{tpu_custom_call.1} parent=11 // pred_check
        %p162 = pneg %p58
      $region14: #{tpu_custom_call.1} parent=11 // pred_check_branch
        %164 = sbr.rel (%p162) target = $region16
      $region15: #{tpu_custom_call.1} parent=11 // pred_region
        _
      $region16: #{tpu_custom_call.1} parent=11 // pred_fallthru
        _
      // Predicated region
      $region17: #{tpu_custom_call.1} parent=11 // pred_check
        %p165 = pneg %p79
      $region18: #{tpu_custom_call.1} parent=11 // pred_check_branch
        %167 = sbr.rel (%p165) target = $region20
      $region19: #{tpu_custom_call.1} parent=11 // pred_region
        _
      $region20: #{tpu_custom_call.1} parent=11 // pred_fallthru
        _
      // Predicated region
      $region21: #{tpu_custom_call.1} parent=11 // pred_check
        %p168 = pneg %p100
      $region22: #{tpu_custom_call.1} parent=11 // pred_check_branch
        %170 = sbr.rel (%p168) target = $region24
      $region23: #{tpu_custom_call.1} parent=11 // pred_region
        _
      $region24: #{tpu_custom_call.1} parent=11 // pred_fallthru
        _
      // Predicated region
      $region25: #{tpu_custom_call.1} parent=11 // pred_check
        %p171 = pneg %p121
      $region26: #{tpu_custom_call.1} parent=11 // pred_check_branch
        %173 = sbr.rel (%p171) target = $region28
      $region27: #{tpu_custom_call.1} parent=11 // pred_region
        _
      $region28: #{tpu_custom_call.1} parent=11 // pred_fallthru
        _
    $region12: #{tpu_custom_call.1} parent=5 // pred_fallthru
      _
    %p174 = scmp.lt.s32.totalorder %s11, 2
    // Predicated region
    $region29: #{tpu_custom_call.1} parent=5 // pred_check
      %p175 = pneg %p174
    $region30: #{tpu_custom_call.1} parent=5 // pred_check_branch
      %177 = sbr.rel (%p175) target = $region32
    $region31: #{tpu_custom_call.1} parent=5 // pred_region
      // Predicated region
      $region33: #{tpu_custom_call.1} parent=31 // pred_check
        %p178 = pneg %p31
      $region34: #{tpu_custom_call.1} parent=31 // pred_check_branch
        %180 = sbr.rel (%p178) target = $region36
      $region35: #{tpu_custom_call.1} parent=31 // pred_region
        %s181 = smul.u32 16, %s11
        %p182 = scmp.lt.s32.totalorder %s181, 31
        %s183 = scalar_select %p182, %s181, 31
        %s184 = smul.addr %s183, 4
        %s185 = scalar_lea.vmem %s0, %s184
        %s186 = smul.u32 16, %s11
      $region36: #{tpu_custom_call.1} parent=31 // pred_fallthru
        _
    $region32: #{tpu_custom_call.1} parent=5 // pred_fallthru
      _
    %p187 = scmp.le.s32.totalorder 1, %s11
    %p188 = scmp.lt.s32.totalorder %s11, 3
    %p189 = pnand %p187, %p188
    %p190 = pneg %p189
    // Predicated region
    $region37: #{tpu_custom_call.1} parent=5 // pred_check
      _
    $region38: #{tpu_custom_call.1} parent=5 // pred_check_branch
      %192 = sbr.rel (%p189) target = $region40
    $region39: #{tpu_custom_call.1} parent=5 // pred_region
      %s193 = ssub.s32 %s11, 1
      %s194 = smul.u32 16, %s16
      %p195 = scmp.lt.s32.totalorder %s194, 31
      %s196 = scalar_select %p195, %s194, 31
      %s197 = smul.addr %s196, 4
      %s198 = scalar_lea.vmem %s0, %s197
      %p199 = pneg %p37
      %p200 = pneg %p34
      %p201 = pneg %p58
      %p202 = pneg %p55
      %p203 = pneg %p79
      %p204 = pneg %p76
      %p205 = pneg %p100
      %p206 = pneg %p97
      %p207 = pneg %p121
      %p208 = pneg %p118
      %p209 = pneg %p147
      %p210 = pneg %p144
      %s211 = smul.u32 16, %s16
      %p212 = scmp.lt.s32.totalorder %s211, 31
      %s213 = scalar_select %p212, %s211, 31
      %s214 = smul.addr %s213, 8
      %s215 = scalar_lea.vmem %s5, %s214
      %s216 = smul.u32 16, %s16
      %p217 = scmp.lt.s32.totalorder %s216, 31
      %s218 = scalar_select %p217, %s216, 31
      %s219 = smul.addr %s218, 4
      %s220 = scalar_lea.vmem %s0, %s219
      %s221 = smul.u32 16, %s16
      %s222 = smul.u32 16, %s16
      %p223 = scmp.lt.s32.totalorder %s222, 31
      %s224 = scalar_select %p223, %s222, 31
      %s225 = smul.addr %s224, 8
      %s226 = scalar_lea.vmem %s5, %s225
      %s227 = smul.u32 16, %s16
      %v229 = vld [vmem:[%s220] sm:$0xf]
      %v230 = vld [vmem:[%s220 + $0x4] sm:$0xf]
      %v231 = vld [vmem:[%s220 + $0x8] sm:$0xf]
      %v232 = vld [vmem:[%s220 + $0xc] sm:$0xf]
      %v233 = vld [vmem:[%s220 + $0x10] sm:$0xf]
      %v234 = vld [vmem:[%s220 + $0x14] sm:$0xf]
      %v235 = vld [vmem:[%s220 + $0x18] sm:$0xf]
      %v236 = vld [vmem:[%s220 + $0x1c] sm:$0xf]
      %v237 = vld [vmem:[%s220 + $0x20] sm:$0xf]
      %v238 = vld [vmem:[%s220 + $0x24] sm:$0xf]
      %v239 = vld [vmem:[%s220 + $0x28] sm:$0xf]
      %v240 = vld [vmem:[%s220 + $0x2c] sm:$0xf]
      %v241 = vld [vmem:[%s220 + $0x30] sm:$0xf]
      %v242 = vld [vmem:[%s220 + $0x34] sm:$0xf]
      %v243 = vld [vmem:[%s220 + $0x38] sm:$0xf]
      %v244 = vld [vmem:[%s220 + $0x3c] sm:$0xf]
      %v245 = vld [vmem:[%s1] sm:$0xf]
      %v246 = vld [vmem:[%s4] sm:$0x1]
      %v247 = vperm.slane %v246, 0
      %v264 = vunpack.c.l.b16 %v229
      %v265 = vunpack.c.l.b16 %v230
      %v266 = vunpack.c.l.b16 %v231
      %v267 = vunpack.c.l.b16 %v232
      %v268 = vunpack.c.l.b16 %v233
      %v269 = vunpack.c.l.b16 %v234
      %v270 = vunpack.c.l.b16 %v235
      %v271 = vunpack.c.l.b16 %v236
      %v272 = vunpack.c.l.b16 %v237
      %v273 = vunpack.c.l.b16 %v238
      %v274 = vunpack.c.l.b16 %v239
      %v275 = vunpack.c.l.b16 %v240
      %v276 = vunpack.c.l.b16 %v241
      %v277 = vunpack.c.l.b16 %v242
      %v278 = vunpack.c.l.b16 %v243
      %v279 = vunpack.c.l.b16 %v244
      %v280 = vpack.c.b16 %v265, %v264
      %v281 = vpack.c.b16 %v267, %v266
      %v282 = vpack.c.b16 %v269, %v268
      %v283 = vpack.c.b16 %v271, %v270
      %v284 = vpack.c.b16 %v273, %v272
      %v285 = vpack.c.b16 %v275, %v274
      %v286 = vpack.c.b16 %v277, %v276
      %v287 = vpack.c.b16 %v279, %v278
      %vm288 = vcmask 64512
      %v290 = vsel %vm288, %v280, 0
      %v293 = vsel %vm288, %v281, 0
      %v296 = vsel %vm288, %v282, 0
      %v299 = vsel %vm288, %v283, 0
      %v302 = vsel %vm288, %v284, 0
      %v305 = vsel %vm288, %v285, 0
      %v308 = vsel %vm288, %v286, 0
      %v311 = vsel %vm288, %v287, 0
      %vm313 = vcmask 1043456
      %v315 = vsel %vm313, %v245, 0
      %317 = vmatpush.bf16.msra.mxu0 0
      %318 = vmatpush.bf16.msra.mxu0 0
      %319 = vmatpush.bf16.msra.mxu0 0
      %320 = vmatpush.bf16.msra.mxu0 0
      %321 = vmatpush.bf16.msra.mxu0 0
      %322 = vmatpush.bf16.msra.mxu0 0
      %323 = vmatpush.bf16.msra.mxu0 0
      %324 = vmatpush.bf16.msra.mxu0 %v315
      %325 = vmatmul.bf16.gmra.mxu0 %v290
      %v326 = vpop.f32.mrf.mxu0
      %v327 = vadd.f32 %v247, %v326
      %v328 = vpop.f32.mrf.mxu0
      %v329 = vadd.f32 %v247, %v328
      %330 = vmatmul.bf16.gmra.mxu0 %v293
      %v331 = vpop.f32.mrf.mxu0
      %v332 = vadd.f32 %v247, %v331
      %v333 = vpop.f32.mrf.mxu0
      %v334 = vadd.f32 %v247, %v333
      %335 = vmatmul.bf16.gmra.mxu0 %v296
      %v336 = vpop.f32.mrf.mxu0
      %v337 = vadd.f32 %v247, %v336
      %v338 = vpop.f32.mrf.mxu0
      %v339 = vadd.f32 %v247, %v338
      %340 = vmatmul.bf16.gmra.mxu0 %v299
      %v341 = vpop.f32.mrf.mxu0
      %v342 = vadd.f32 %v247, %v341
      %v343 = vpop.f32.mrf.mxu0
      %v344 = vadd.f32 %v247, %v343
      %345 = vmatmul.bf16.gmra.mxu0 %v302
      %v346 = vpop.f32.mrf.mxu0
      %v347 = vadd.f32 %v247, %v346
      %v348 = vpop.f32.mrf.mxu0
      %v349 = vadd.f32 %v247, %v348
      %350 = vmatmul.bf16.gmra.mxu0 %v305
      %v351 = vpop.f32.mrf.mxu0
      %v352 = vadd.f32 %v247, %v351
      %v353 = vpop.f32.mrf.mxu0
      %v354 = vadd.f32 %v247, %v353
      %355 = vmatmul.bf16.gmra.mxu0 %v308
      %v356 = vpop.f32.mrf.mxu0
      %v357 = vadd.f32 %v247, %v356
      %v358 = vpop.f32.mrf.mxu0
      %v359 = vadd.f32 %v247, %v358
      %360 = vmatmul.bf16.gmra.mxu0 %v311
      %v361 = vpop.f32.mrf.mxu0
      %v362 = vadd.f32 %v247, %v361
      %v363 = vpop.f32.mrf.mxu0
      %v364 = vadd.f32 %v247, %v363
      %365 = vdwg.mxu0
      %v366 = vmax.f32 %v327, 0.0
      %v367 = vmax.f32 %v329, 0.0
      %v368 = vmax.f32 %v332, 0.0
      %v369 = vmax.f32 %v334, 0.0
      %v370 = vmax.f32 %v337, 0.0
      %v371 = vmax.f32 %v339, 0.0
      %v372 = vmax.f32 %v342, 0.0
      %v373 = vmax.f32 %v344, 0.0
      %v374 = vmax.f32 %v347, 0.0
      %v375 = vmax.f32 %v349, 0.0
      %v376 = vmax.f32 %v352, 0.0
      %v377 = vmax.f32 %v354, 0.0
      %v378 = vmax.f32 %v357, 0.0
      %v379 = vmax.f32 %v359, 0.0
      %v380 = vmax.f32 %v362, 0.0
      %v381 = vmax.f32 %v364, 0.0
      %v382 = vpack.c.bf16 %v367, %v366
      %v383 = vpack.c.bf16 %v369, %v368
      %v384 = vpack.c.bf16 %v371, %v370
      %v385 = vpack.c.bf16 %v373, %v372
      %v386 = vpack.c.bf16 %v375, %v374
      %v387 = vpack.c.bf16 %v377, %v376
      %v388 = vpack.c.bf16 %v379, %v378
      %v389 = vpack.c.bf16 %v381, %v380
      %v390 = vld [vmem:[%s2] sm:$0xf]
      %v391 = vld [vmem:[%s2 + $0x4] sm:$0xf]
      %v392 = vld [vmem:[%s2 + $0x8] sm:$0xf]
      %v393 = vld [vmem:[%s2 + $0xc] sm:$0xf]
      %v394 = vld [vmem:[%s2 + $0x10] sm:$0xf]
      %v395 = vld [vmem:[%s2 + $0x14] sm:$0xf]
      %v396 = vld [vmem:[%s2 + $0x18] sm:$0xf]
      %v397 = vld [vmem:[%s2 + $0x1c] sm:$0xf]
      %v398 = vld [vmem:[%s2 + $0x20] sm:$0xf]
      %v399 = vld [vmem:[%s2 + $0x24] sm:$0xf]
      %v400 = vld [vmem:[%s2 + $0x28] sm:$0xf]
      %v401 = vld [vmem:[%s2 + $0x2c] sm:$0xf]
      %v402 = vld [vmem:[%s2 + $0x30] sm:$0xf]
      %v403 = vld [vmem:[%s2 + $0x34] sm:$0xf]
      %v404 = vld [vmem:[%s2 + $0x38] sm:$0xf]
      %v405 = vld [vmem:[%s2 + $0x3c] sm:$0xf]
      %v406 = vld [vmem:[%s4 + $0x1] sm:$0x1]
      %v407 = vperm.slane %v406, 0
      %v424 = vunpack.c.l.b16 %v390
      %v425 = vunpack.c.l.b16 %v391
      %v426 = vunpack.c.l.b16 %v392
      %v427 = vunpack.c.l.b16 %v393
      %v428 = vunpack.c.l.b16 %v394
      %v429 = vunpack.c.l.b16 %v395
      %v430 = vunpack.c.l.b16 %v396
      %v431 = vunpack.c.l.b16 %v397
      %v432 = vunpack.c.l.b16 %v398
      %v433 = vunpack.c.l.b16 %v399
      %v434 = vunpack.c.l.b16 %v400
      %v435 = vunpack.c.l.b16 %v401
      %v436 = vunpack.c.l.b16 %v402
      %v437 = vunpack.c.l.b16 %v403
      %v438 = vunpack.c.l.b16 %v404
      %v439 = vunpack.c.l.b16 %v405
      %v440 = vpack.c.b16 %v425, %v424
      %v441 = vpack.c.b16 %v427, %v426
      %v442 = vpack.c.b16 %v429, %v428
      %v443 = vpack.c.b16 %v431, %v430
      %v444 = vpack.c.b16 %v433, %v432
      %v445 = vpack.c.b16 %v435, %v434
      %v446 = vpack.c.b16 %v437, %v436
      %v447 = vpack.c.b16 %v439, %v438
      %456 = vmatpush.bf16.msra.mxu0 %v447
      %457 = vmatpush.bf16.msra.mxu0 %v446
      %458 = vmatpush.bf16.msra.mxu0 %v445
      %459 = vmatpush.bf16.msra.mxu0 %v444
      %460 = vmatpush.bf16.msra.mxu0 %v443
      %461 = vmatpush.bf16.msra.mxu0 %v442
      %462 = vmatpush.bf16.msra.mxu0 %v441
      %463 = vmatpush.bf16.msra.mxu0 %v440
      %464 = vmatmul.bf16.gmra.mxu0 %v382
      %v465 = vpop.f32.mrf.mxu0
      %v466 = vadd.f32 %v407, %v465
      %v467 = vpop.f32.mrf.mxu0
      %v468 = vadd.f32 %v407, %v467
      %469 = vmatmul.bf16.gmra.mxu0 %v383
      %v470 = vpop.f32.mrf.mxu0
      %v471 = vadd.f32 %v407, %v470
      %v472 = vpop.f32.mrf.mxu0
      %v473 = vadd.f32 %v407, %v472
      %474 = vmatmul.bf16.gmra.mxu0 %v384
      %v475 = vpop.f32.mrf.mxu0
      %v476 = vadd.f32 %v407, %v475
      %v477 = vpop.f32.mrf.mxu0
      %v478 = vadd.f32 %v407, %v477
      %479 = vmatmul.bf16.gmra.mxu0 %v385
      %v480 = vpop.f32.mrf.mxu0
      %v481 = vadd.f32 %v407, %v480
      %v482 = vpop.f32.mrf.mxu0
      %v483 = vadd.f32 %v407, %v482
      %484 = vmatmul.bf16.gmra.mxu0 %v386
      %v485 = vpop.f32.mrf.mxu0
      %v486 = vadd.f32 %v407, %v485
      %v487 = vpop.f32.mrf.mxu0
      %v488 = vadd.f32 %v407, %v487
      %489 = vmatmul.bf16.gmra.mxu0 %v387
      %v490 = vpop.f32.mrf.mxu0
      %v491 = vadd.f32 %v407, %v490
      %v492 = vpop.f32.mrf.mxu0
      %v493 = vadd.f32 %v407, %v492
      %494 = vmatmul.bf16.gmra.mxu0 %v388
      %v495 = vpop.f32.mrf.mxu0
      %v496 = vadd.f32 %v407, %v495
      %v497 = vpop.f32.mrf.mxu0
      %v498 = vadd.f32 %v407, %v497
      %499 = vmatmul.bf16.gmra.mxu0 %v389
      %v500 = vpop.f32.mrf.mxu0
      %v501 = vadd.f32 %v407, %v500
      %v502 = vpop.f32.mrf.mxu0
      %v503 = vadd.f32 %v407, %v502
      %504 = vdwg.mxu0
      %v505 = vmax.f32 %v466, 0.0
      %v506 = vmax.f32 %v468, 0.0
      %v507 = vmax.f32 %v471, 0.0
      %v508 = vmax.f32 %v473, 0.0
      %v509 = vmax.f32 %v476, 0.0
      %v510 = vmax.f32 %v478, 0.0
      %v511 = vmax.f32 %v481, 0.0
      %v512 = vmax.f32 %v483, 0.0
      %v513 = vmax.f32 %v486, 0.0
      %v514 = vmax.f32 %v488, 0.0
      %v515 = vmax.f32 %v491, 0.0
      %v516 = vmax.f32 %v493, 0.0
      %v517 = vmax.f32 %v496, 0.0
      %v518 = vmax.f32 %v498, 0.0
      %v519 = vmax.f32 %v501, 0.0
      %v520 = vmax.f32 %v503, 0.0
      %v521 = vpack.c.bf16 %v506, %v505
      %v522 = vpack.c.bf16 %v508, %v507
      %v523 = vpack.c.bf16 %v510, %v509
      %v524 = vpack.c.bf16 %v512, %v511
      %v525 = vpack.c.bf16 %v514, %v513
      %v526 = vpack.c.bf16 %v516, %v515
      %v527 = vpack.c.bf16 %v518, %v517
      %v528 = vpack.c.bf16 %v520, %v519
      %v529 = vld [vmem:[%s3] sm:$0xf]
      %v530 = vld [vmem:[%s3 + $0x4] sm:$0xf]
      %v531 = vld [vmem:[%s3 + $0x8] sm:$0xf]
      %v532 = vld [vmem:[%s3 + $0xc] sm:$0xf]
      %v533 = vld [vmem:[%s3 + $0x10] sm:$0xf]
      %v534 = vld [vmem:[%s3 + $0x14] sm:$0xf]
      %v535 = vld [vmem:[%s3 + $0x18] sm:$0xf]
      %v536 = vld [vmem:[%s3 + $0x1c] sm:$0xf]
      %v537 = vld [vmem:[%s3 + $0x20] sm:$0xf]
      %v538 = vld [vmem:[%s3 + $0x24] sm:$0xf]
      %v539 = vld [vmem:[%s3 + $0x28] sm:$0xf]
      %v540 = vld [vmem:[%s3 + $0x2c] sm:$0xf]
      %v541 = vld [vmem:[%s3 + $0x30] sm:$0xf]
      %v542 = vld [vmem:[%s3 + $0x34] sm:$0xf]
      %v543 = vld [vmem:[%s3 + $0x38] sm:$0xf]
      %v544 = vld [vmem:[%s3 + $0x3c] sm:$0xf]
      %v545 = vld [vmem:[%s4 + $0x2] sm:$0x1]
      %v546 = vperm.slane %v545, 0
      %v563 = vunpack.c.l.b16 %v529
      %v564 = vunpack.c.l.b16 %v530
      %v565 = vunpack.c.l.b16 %v531
      %v566 = vunpack.c.l.b16 %v532
      %v567 = vunpack.c.l.b16 %v533
      %v568 = vunpack.c.l.b16 %v534
      %v569 = vunpack.c.l.b16 %v535
      %v570 = vunpack.c.l.b16 %v536
      %v571 = vunpack.c.l.b16 %v537
      %v572 = vunpack.c.l.b16 %v538
      %v573 = vunpack.c.l.b16 %v539
      %v574 = vunpack.c.l.b16 %v540
      %v575 = vunpack.c.l.b16 %v541
      %v576 = vunpack.c.l.b16 %v542
      %v577 = vunpack.c.l.b16 %v543
      %v578 = vunpack.c.l.b16 %v544
      %v579 = vpack.c.b16 %v564, %v563
      %v580 = vpack.c.b16 %v566, %v565
      %v581 = vpack.c.b16 %v568, %v567
      %v582 = vpack.c.b16 %v570, %v569
      %v583 = vpack.c.b16 %v572, %v571
      %v584 = vpack.c.b16 %v574, %v573
      %v585 = vpack.c.b16 %v576, %v575
      %v586 = vpack.c.b16 %v578, %v577
      %595 = vmatpush.bf16.msra.mxu0 %v586
      %596 = vmatpush.bf16.msra.mxu0 %v585
      %597 = vmatpush.bf16.msra.mxu0 %v584
      %598 = vmatpush.bf16.msra.mxu0 %v583
      %599 = vmatpush.bf16.msra.mxu0 %v582
      %600 = vmatpush.bf16.msra.mxu0 %v581
      %601 = vmatpush.bf16.msra.mxu0 %v580
      %602 = vmatpush.bf16.msra.mxu0 %v579
      %603 = vmatmul.bf16.gmra.mxu0 %v521
      %v604 = vpop.f32.mrf.mxu0
      %v605 = vadd.f32 %v546, %v604
      %v606 = vpop.f32.mrf.mxu0
      %v607 = vadd.f32 %v546, %v606
      %608 = vmatmul.bf16.gmra.mxu0 %v522
      %v609 = vpop.f32.mrf.mxu0
      %v610 = vadd.f32 %v546, %v609
      %v611 = vpop.f32.mrf.mxu0
      %v612 = vadd.f32 %v546, %v611
      %613 = vmatmul.bf16.gmra.mxu0 %v523
      %v614 = vpop.f32.mrf.mxu0
      %v615 = vadd.f32 %v546, %v614
      %v616 = vpop.f32.mrf.mxu0
      %v617 = vadd.f32 %v546, %v616
      %618 = vmatmul.bf16.gmra.mxu0 %v524
      %v619 = vpop.f32.mrf.mxu0
      %v620 = vadd.f32 %v546, %v619
      %v621 = vpop.f32.mrf.mxu0
      %v622 = vadd.f32 %v546, %v621
      %623 = vmatmul.bf16.gmra.mxu0 %v525
      %v624 = vpop.f32.mrf.mxu0
      %v625 = vadd.f32 %v546, %v624
      %v626 = vpop.f32.mrf.mxu0
      %v627 = vadd.f32 %v546, %v626
      %628 = vmatmul.bf16.gmra.mxu0 %v526
      %v629 = vpop.f32.mrf.mxu0
      %v630 = vadd.f32 %v546, %v629
      %v631 = vpop.f32.mrf.mxu0
      %v632 = vadd.f32 %v546, %v631
      %633 = vmatmul.bf16.gmra.mxu0 %v527
      %v634 = vpop.f32.mrf.mxu0
      %v635 = vadd.f32 %v546, %v634
      %v636 = vpop.f32.mrf.mxu0
      %v637 = vadd.f32 %v546, %v636
      %638 = vmatmul.bf16.gmra.mxu0 %v528
      %v639 = vpop.f32.mrf.mxu0
      %v640 = vadd.f32 %v546, %v639
      %v641 = vpop.f32.mrf.mxu0
      %v642 = vadd.f32 %v546, %v641
      %643 = vdwg.mxu0
      %vm644 = vcmask 130048
      %645 = vst.msk [vmem:[%s226] sm:$0xff] %vm644, %v605
      %646 = vst.msk [vmem:[%s226 + $0x8] sm:$0xff] %vm644, %v607
      %647 = vst.msk [vmem:[%s226 + $0x10] sm:$0xff] %vm644, %v610
      %648 = vst.msk [vmem:[%s226 + $0x18] sm:$0xff] %vm644, %v612
      %649 = vst.msk [vmem:[%s226 + $0x20] sm:$0xff] %vm644, %v615
      %650 = vst.msk [vmem:[%s226 + $0x28] sm:$0xff] %vm644, %v617
      %651 = vst.msk [vmem:[%s226 + $0x30] sm:$0xff] %vm644, %v620
      %652 = vst.msk [vmem:[%s226 + $0x38] sm:$0xff] %vm644, %v622
      %653 = vst.msk [vmem:[%s226 + $0x40] sm:$0xff] %vm644, %v625
      %654 = vst.msk [vmem:[%s226 + $0x48] sm:$0xff] %vm644, %v627
      %655 = vst.msk [vmem:[%s226 + $0x50] sm:$0xff] %vm644, %v630
      %656 = vst.msk [vmem:[%s226 + $0x58] sm:$0xff] %vm644, %v632
      %657 = vst.msk [vmem:[%s226 + $0x60] sm:$0xff] %vm644, %v635
      %658 = vst.msk [vmem:[%s226 + $0x68] sm:$0xff] %vm644, %v637
      %659 = vst.msk [vmem:[%s226 + $0x70] sm:$0xff] %vm644, %v640
      %660 = vst.msk [vmem:[%s226 + $0x78] sm:$0xff] %vm644, %v642
      %s661 = smul.u32 16, %s16
      %p662 = scmp.lt.s32.totalorder %s661, 31
      %s663 = scalar_select %p662, %s661, 31
      %s664 = smul.addr %s663, 8
      %s665 = scalar_lea.vmem %s5, %s664
      // Predicated region
      $region41: #{tpu_custom_call.1} parent=39 // pred_check
        %p666 = pneg %p144
      $region42: #{tpu_custom_call.1} parent=39 // pred_check_branch
        %668 = sbr.rel (%p666) target = $region44
      $region43: #{tpu_custom_call.1} parent=39 // pred_region
        %s669 = smul.u32 16, %s16
      $region44: #{tpu_custom_call.1} parent=39 // pred_fallthru
        _
    $region40: #{tpu_custom_call.1} parent=5 // pred_fallthru
      _
    %p670 = scmp.le.s32.totalorder 2, %s11
    // Predicated region
    $region45: #{tpu_custom_call.1} parent=5 // pred_check
      %p671 = pneg %p670
    $region46: #{tpu_custom_call.1} parent=5 // pred_check_branch
      %673 = sbr.rel (%p671) target = $region48
    $region47: #{tpu_custom_call.1} parent=5 // pred_region
      %s674 = ssub.s32 %s11, 2
      // Predicated region
      $region49: #{tpu_custom_call.1} parent=47 // pred_check
        %p675 = pneg %p150
      $region50: #{tpu_custom_call.1} parent=47 // pred_check_branch
        %677 = sbr.rel (%p675) target = $region52
      $region51: #{tpu_custom_call.1} parent=47 // pred_region
        %s678 = smul.u32 16, %s17
        %p679 = scmp.lt.s32.totalorder %s678, 31
        %s680 = scalar_select %p679, %s678, 31
        %s681 = smul.addr %s680, 8
        %s682 = scalar_lea.vmem %s5, %s681
      $region52: #{tpu_custom_call.1} parent=47 // pred_fallthru
        _
    $region48: #{tpu_custom_call.1} parent=5 // pred_fallthru
      _
  $region6: #{tpu_custom_call.1} parent=0 // loop_footer
    %s15 = sadd.s32 1, %s11
  $region7: #{tpu_custom_call.1} parent=0 // loop_footer_branch
    %10 = sbr.rel target = $region3
  $region8: #{tpu_custom_call.1} parent=0 // loop_exit
    _

</llo_original>
